<compile_context>
chip_gen: v5e
topology: v5e:2x2
jax: 0.10.0
libtpu: 0.0.40
codegen_flags: <defaults>
</compile_context>

<pallas_src>
import functools
from typing import NamedTuple

import numpy as np

import jax
import jax.numpy as jnp
from jax.experimental import pallas as pl
from jax.experimental.pallas import tpu as pltpu

_VMEM_LIMIT_BYTES = 48 * 1024 * 1024  # above scoped defaults, headroom on v7x
_SMALL_KN = 2048                      # K/N threshold for the single-tile path


def _round_up(x, m):
    return (x + m - 1) // m * m


# ----------------------------- Pallas kernels ------------------------------

def _fused_linear_kernel(x_ref, w_ref, b_ref, *rest, ln_in, ln_out,
                         activation, has_res, k_dim, n_dim, eps):
    """out = [LN_out](act([LN_in](x) @ w + bias) + residual). K/N untiled."""
    idx = 0
    if ln_in:
        gi_ref, bi_ref = rest[idx], rest[idx + 1]
        idx += 2
    if ln_out:
        go_ref, bo_ref = rest[idx], rest[idx + 1]
        idx += 2
    if has_res:
        res_ref = rest[idx]
        idx += 1
    o_ref = rest[-1]

    x = x_ref[...].astype(jnp.float32)
    if ln_in:
        # padded columns are zero, so sum/k_dim gives exact mean/var
        mu = jnp.sum(x, axis=-1, keepdims=True) / k_dim
        var = jnp.sum(x * x, axis=-1, keepdims=True) / k_dim - mu * mu
        x = (x - mu) * jax.lax.rsqrt(var + eps) * gi_ref[...] + bi_ref[...]
    y = jnp.dot(x.astype(jnp.bfloat16), w_ref[...],
                preferred_element_type=jnp.float32) + b_ref[...]
    if activation == "gelu":
        y = jax.nn.gelu(y)                      # tanh approx -> EUP slot
    elif activation == "relu":
        y = jnp.maximum(y, 0.0)
    if has_res:
        y = y + res_ref[...].astype(jnp.float32)
    if ln_out:
        mu = jnp.sum(y, axis=-1, keepdims=True) / n_dim
        var = jnp.sum(y * y, axis=-1, keepdims=True) / n_dim - mu * mu
        y = (y - mu) * jax.lax.rsqrt(var + eps) * go_ref[...] + bo_ref[...]
    o_ref[...] = y.astype(o_ref.dtype)


def _mlp_kernel(x_ref, g_ref, bt_ref, w1_ref, b1_ref, w2_ref, b2_ref, o_ref,
                *, d_dim, eps):
    """Pre-LN transformer MLP with residual: x + fc2(gelu(fc1(LN(x))))."""
    x = x_ref[...].astype(jnp.float32)
    mu = jnp.sum(x, axis=-1, keepdims=True) / d_dim
    var = jnp.sum(x * x, axis=-1, keepdims=True) / d_dim - mu * mu
    xn = (x - mu) * jax.lax.rsqrt(var + eps) * g_ref[...] + bt_ref[...]
    h = jnp.dot(xn.astype(jnp.bfloat16), w1_ref[...],
                preferred_element_type=jnp.float32) + b1_ref[...]
    h = jax.nn.gelu(h)
    y = jnp.dot(h.astype(jnp.bfloat16), w2_ref[...],
                preferred_element_type=jnp.float32) + b2_ref[...]
    o_ref[...] = (y + x).astype(o_ref.dtype)


def _matmul_kernel(a_ref, b_ref, bias_ref, *rest, activation, nk, has_res):
    """Generic 3-D-grid tiled matmul with fused bias/activation/residual."""
    if has_res:
        res_ref, o_ref, acc_ref = rest
    else:
        o_ref, acc_ref = rest

    @pl.when(pl.program_id(2) == 0)
    def _init():
        acc_ref[...] = jnp.zeros_like(acc_ref)

    acc_ref[...] += jnp.dot(a_ref[...], b_ref[...],
                            preferred_element_type=jnp.float32)

    @pl.when(pl.program_id(2) == nk - 1)
    def _epilogue():
        out = acc_ref[...] + bias_ref[...]
        if activation == "gelu":
            out = jax.nn.gelu(out)
        elif activation == "relu":
            out = jnp.maximum(out, 0.0)
        if has_res:
            out = out + res_ref[...]
        o_ref[...] = out.astype(o_ref.dtype)


def _window_attn_kernel(q_ref, k_ref, v_ref, bias_ref, o_ref, *, scale):
    """Window attention for a block of `tb` windows, all heads at once."""
    tb, nh, win, hd = q_ref.shape
    q = q_ref[...].astype(jnp.float32) * scale
    k = k_ref[...].astype(jnp.float32)
    v = v_ref[...].astype(jnp.float32)

    qf = q.reshape(tb * nh, win, hd)
    kf = k.reshape(tb * nh, win, hd)
    s = jax.lax.dot_general(qf, kf, (((2,), (2,)), ((0,), (0,))),
                            preferred_element_type=jnp.float32)
    s = s.reshape(tb, nh, win, win) + bias_ref[...][None]

    s = s - jnp.max(s, axis=-1, keepdims=True)
    p = jnp.exp(s)
    p = p / jnp.sum(p, axis=-1, keepdims=True)

    pf = p.reshape(tb * nh, win, win)
    vf = v.reshape(tb * nh, win, hd)
    o = jax.lax.dot_general(pf, vf, (((2,), (1,)), ((0,), (0,))),
                            preferred_element_type=jnp.float32)
    o_ref[...] = o.reshape(tb, nh, win, hd).astype(o_ref.dtype)


# ----------------------------- Pallas wrappers ------------------------------

def _pallas_matmul_big(a, b, bias=None, residual=None, activation=None,
                       out_dtype=jnp.float32, tm=128, tn=128, tk=128):
    """Fallback tiled matmul for large K/N (f32 accum scratch, K grid)."""
    M, K = a.shape
    K2, N = b.shape
    assert K == K2
    Mp, Kp, Np = _round_up(M, tm), _round_up(K, tk), _round_up(N, tn)

    a_p = jnp.pad(a, ((0, Mp - M), (0, Kp - K))).astype(jnp.bfloat16)
    b_p = jnp.pad(b, ((0, Kp - K), (0, Np - N))).astype(jnp.bfloat16)
    if bias is None:
        bias = jnp.zeros((N,), jnp.float32)
    bias_p = jnp.pad(bias.astype(jnp.float32), (0, Np - N)).reshape(1, Np)

    has_res = residual is not None
    inputs = [a_p, b_p, bias_p]
    in_specs = [
        pl.BlockSpec((tm, tk), lambda i, j, k: (i, k)),
        pl.BlockSpec((tk, tn), lambda i, j, k: (k, j)),
        pl.BlockSpec((1, tn), lambda i, j, k: (0, j)),
    ]
    if has_res:
        res_p = jnp.pad(residual.astype(jnp.float32),
                        ((0, Mp - M), (0, Np - N)))
        inputs.append(res_p)
        in_specs.append(pl.BlockSpec((tm, tn), lambda i, j, k: (i, j)))

    grid = (Mp // tm, Np // tn, Kp // tk)
    kernel = functools.partial(_matmul_kernel, activation=activation,
                               nk=grid[2], has_res=has_res)
    out = pl.pallas_call(
        kernel,
        out_shape=jax.ShapeDtypeStruct((Mp, Np), out_dtype),
        grid_spec=pltpu.PrefetchScalarGridSpec(
            num_scalar_prefetch=0,
            grid=grid,
            in_specs=in_specs,
            out_specs=pl.BlockSpec((tm, tn), lambda i, j, k: (i, j)),
            scratch_shapes=[pltpu.VMEM((tm, tn), jnp.float32)]),
        compiler_params=pltpu.CompilerParams(
            dimension_semantics=("parallel", "parallel", "arbitrary"),
            vmem_limit_bytes=_VMEM_LIMIT_BYTES),
    )(*inputs)
    return out[:M, :N]


def pallas_linear(a, w, bias=None, residual=None, activation=None,
                  ln_in=None, ln_out=None, out_dtype=jnp.float32, eps=1e-5):
    """out = [LN_out](act([LN_in](a) @ w + bias) + residual).

    Small-K/N fast path: K and N live in a single VMEM tile, grid over M only
    (no K loop, no accumulator reload, LN fusion allowed). Falls back to the
    3-D tiled kernel for large K/N (no LN fusion there).
    """
    M, K = a.shape
    K2, N = w.shape
    assert K == K2
    Kp, Np = _round_up(K, 128), _round_up(N, 128)

    if Kp > _SMALL_KN or Np > _SMALL_KN:
        assert ln_in is None and ln_out is None
        return _pallas_matmul_big(a, w, bias, residual, activation, out_dtype)

    tm = min(128, _round_up(M, 8))
    Mp = _round_up(M, tm)

    a_p = jnp.pad(a.astype(jnp.float32), ((0, Mp - M), (0, Kp - K)))
    w_p = jnp.pad(w, ((0, Kp - K), (0, Np - N))).astype(jnp.bfloat16)
    if bias is None:
        bias = jnp.zeros((N,), jnp.float32)
    b_p = jnp.pad(bias.astype(jnp.float32), (0, Np - N)).reshape(1, Np)

    inputs = [a_p, w_p, b_p]
    in_specs = [
        pl.BlockSpec((tm, Kp), lambda i: (i, 0)),
        pl.BlockSpec((Kp, Np), lambda i: (0, 0)),
        pl.BlockSpec((1, Np), lambda i: (0, 0)),
    ]
    if ln_in is not None:
        g, bt = ln_in
        inputs += [jnp.pad(g.astype(jnp.float32), (0, Kp - K)).reshape(1, Kp),
                   jnp.pad(bt.astype(jnp.float32), (0, Kp - K)).reshape(1, Kp)]
        in_specs += [pl.BlockSpec((1, Kp), lambda i: (0, 0))] * 2
    if ln_out is not None:
        g, bt = ln_out
        inputs += [jnp.pad(g.astype(jnp.float32), (0, Np - N)).reshape(1, Np),
                   jnp.pad(bt.astype(jnp.float32), (0, Np - N)).reshape(1, Np)]
        in_specs += [pl.BlockSpec((1, Np), lambda i: (0, 0))] * 2
    if residual is not None:
        res_p = jnp.pad(residual.astype(jnp.float32),
                        ((0, Mp - M), (0, Np - N)))
        inputs.append(res_p)
        in_specs.append(pl.BlockSpec((tm, Np), lambda i: (i, 0)))

    kernel = functools.partial(
        _fused_linear_kernel, ln_in=ln_in is not None,
        ln_out=ln_out is not None, activation=activation,
        has_res=residual is not None, k_dim=K, n_dim=N, eps=eps)
    out = pl.pallas_call(
        kernel,
        out_shape=jax.ShapeDtypeStruct((Mp, Np), out_dtype),
        grid=(Mp // tm,),
        in_specs=in_specs,
        out_specs=pl.BlockSpec((tm, Np), lambda i: (i, 0)),
        compiler_params=pltpu.CompilerParams(
            dimension_semantics=("parallel",),
            vmem_limit_bytes=_VMEM_LIMIT_BYTES),
    )(*inputs)
    return out[:M, :N]


def pallas_mlp(x, gamma, beta, w1, b1, w2, b2, eps=1e-5):
    """x + fc2(gelu(fc1(LN(x)))) in ONE kernel; hidden never hits HBM."""
    M, D = x.shape
    Hd = w1.shape[1]
    Dp, Hdp = _round_up(D, 128), _round_up(Hd, 128)
    tm = min(128, _round_up(M, 8))
    Mp = _round_up(M, tm)

    x_p = jnp.pad(x.astype(jnp.float32), ((0, Mp - M), (0, Dp - D)))
    w1_p = jnp.pad(w1, ((0, Dp - D), (0, Hdp - Hd))).astype(jnp.bfloat16)
    w2_p = jnp.pad(w2, ((0, Hdp - Hd), (0, Dp - D))).astype(jnp.bfloat16)
    b1_p = jnp.pad(b1.astype(jnp.float32), (0, Hdp - Hd)).reshape(1, Hdp)
    b2_p = jnp.pad(b2.astype(jnp.float32), (0, Dp - D)).reshape(1, Dp)
    g_p = jnp.pad(gamma.astype(jnp.float32), (0, Dp - D)).reshape(1, Dp)
    bt_p = jnp.pad(beta.astype(jnp.float32), (0, Dp - D)).reshape(1, Dp)

    out = pl.pallas_call(
        functools.partial(_mlp_kernel, d_dim=D, eps=eps),
        out_shape=jax.ShapeDtypeStruct((Mp, Dp), jnp.float32),
        grid=(Mp // tm,),
        in_specs=[pl.BlockSpec((tm, Dp), lambda i: (i, 0)),
                  pl.BlockSpec((1, Dp), lambda i: (0, 0)),
                  pl.BlockSpec((1, Dp), lambda i: (0, 0)),
                  pl.BlockSpec((Dp, Hdp), lambda i: (0, 0)),
                  pl.BlockSpec((1, Hdp), lambda i: (0, 0)),
                  pl.BlockSpec((Hdp, Dp), lambda i: (0, 0)),
                  pl.BlockSpec((1, Dp), lambda i: (0, 0))],
        out_specs=pl.BlockSpec((tm, Dp), lambda i: (i, 0)),
        compiler_params=pltpu.CompilerParams(
            dimension_semantics=("parallel",),
            vmem_limit_bytes=_VMEM_LIMIT_BYTES),
    )(x_p, g_p, bt_p, w1_p, b1_p, w2_p, b2_p)
    return out[:M, :D]


def pallas_window_attention(q, k, v, rel_bias, tb=8):
    """q,k,v: [nW, heads, win, head_dim]; rel_bias: [heads, win, win]."""
    nW, nh, win, hd = q.shape
    nWp = _round_up(nW, tb)
    if nWp != nW:
        padw = ((0, nWp - nW), (0, 0), (0, 0), (0, 0))
        q, k, v = jnp.pad(q, padw), jnp.pad(k, padw), jnp.pad(v, padw)
    scale = float(hd) ** -0.5
    out = pl.pallas_call(
        functools.partial(_window_attn_kernel, scale=scale),
        out_shape=jax.ShapeDtypeStruct((nWp, nh, win, hd), jnp.float32),
        grid=(nWp // tb,),
        in_specs=[pl.BlockSpec((tb, nh, win, hd), lambda i: (i, 0, 0, 0)),
                  pl.BlockSpec((tb, nh, win, hd), lambda i: (i, 0, 0, 0)),
                  pl.BlockSpec((tb, nh, win, hd), lambda i: (i, 0, 0, 0)),
                  pl.BlockSpec((nh, win, win), lambda i: (0, 0, 0))],
        out_specs=pl.BlockSpec((tb, nh, win, hd), lambda i: (i, 0, 0, 0)),
        compiler_params=pltpu.CompilerParams(
            dimension_semantics=("parallel",),
            vmem_limit_bytes=_VMEM_LIMIT_BYTES),
    )(q, k, v, rel_bias)
    return out[:nW]


# ------------------------------- Model glue ---------------------------------

class SwinConfig(NamedTuple):
    img_size: tuple = (16, 180)
    in_chans: int = 1
    embed_dim: int = 96
    depths: tuple = (2, 2)
    num_heads: tuple = (3, 6)
    patch_size: tuple = (1, 45)
    window_size: tuple = (1, 4)
    mlp_ratio: float = 4.0


def _rel_pos_bias(key, wh, ww, nh):
    """Standard Swin relative position bias -> [heads, win, win]."""
    coords = np.stack(np.meshgrid(np.arange(wh), np.arange(ww), indexing="ij"))
    coords = coords.reshape(2, -1)
    rel = (coords[:, :, None] - coords[:, None, :]).transpose(1, 2, 0)
    rel = rel.astype(np.int64)
    rel[:, :, 0] += wh - 1
    rel[:, :, 1] += ww - 1
    rel[:, :, 0] *= 2 * ww - 1
    idx = rel.sum(-1)                                       # [win, win]
    table = 0.02 * jax.random.normal(
        key, ((2 * wh - 1) * (2 * ww - 1), nh), jnp.float32)
    bias = table[idx.reshape(-1)].reshape(wh * ww, wh * ww, nh)
    return jnp.transpose(bias, (2, 0, 1))


def build_params(key, cfg: SwinConfig):
    H, W = cfg.img_size
    ph, pw = cfg.patch_size
    Hp, Wp = H // ph, W // pw
    wh = min(cfg.window_size[0], Hp)
    ww = min(cfg.window_size[1], Wp)
    D = cfg.embed_dim
    hidden = int(D * cfg.mlp_ratio)
    C = cfg.in_chans

    n_blocks = sum(cfg.depths)
    keys = iter(jax.random.split(key, 8 + 8 * n_blocks))

    def nrm(shape, scale=0.02):
        return scale * jax.random.normal(next(keys), shape, jnp.float32)

    params = {
        # weights stored directly in [in, out] matmul layout (no .T copies)
        "patch_w": nrm((C * ph * pw, D)),
        "patch_b": jnp.zeros((D,), jnp.float32),
        "patch_ln_g": jnp.ones((D,), jnp.float32),
        "patch_ln_b": jnp.zeros((D,), jnp.float32),
        "conv_w": nrm((C, D, 3, 3)),          # PyTorch Conv2d layout
        "conv_b": jnp.zeros((C,), jnp.float32),
        "blocks": [],
    }
    for stage_i, depth in enumerate(cfg.depths):
        nh = cfg.num_heads[stage_i]
        for _ in range(depth):
            params["blocks"].append({
                "ln1_g": jnp.ones((D,), jnp.float32),
                "ln1_b": jnp.zeros((D,), jnp.float32),
                "qkv_w": nrm((D, 3 * D)),
                "qkv_b": jnp.zeros((3 * D,), jnp.float32),
                "proj_w": nrm((D, D)),
                "proj_b": jnp.zeros((D,), jnp.float32),
                "ln2_g": jnp.ones((D,), jnp.float32),
                "ln2_b": jnp.zeros((D,), jnp.float32),
                "fc1_w": nrm((D, hidden)),
                "fc1_b": jnp.zeros((hidden,), jnp.float32),
                "fc2_w": nrm((hidden, D)),
                "fc2_b": jnp.zeros((D,), jnp.float32),
                "rel_bias": _rel_pos_bias(next(keys), wh, ww, nh),
            })
    return params


def swin_block(tokens, B, Hp, Wp, p, *, num_heads, window, shift):
    M, D = tokens.shape
    nh = num_heads
    hd = D // nh
    wh, ww = window
    sh, sw = shift
    nwh, nww = Hp // wh, Wp // ww

    # --- window multi-head self-attention (LN1 fused into QKV kernel) ---
    shortcut = tokens
    qkv = pallas_linear(tokens, p["qkv_w"], bias=p["qkv_b"],
                        ln_in=(p["ln1_g"], p["ln1_b"]))      # [M, 3D]
    qkv = qkv.reshape(B, Hp, Wp, 3 * D)
    if sh or sw:
        # TODO(synk): wrapped-window attention mask omitted (never triggered
        #             for SwinDenoise defaults since shift == 0).
        qkv = jnp.roll(qkv, shift=(-sh, -sw), axis=(1, 2))
    qkv = qkv.reshape(B, nwh, wh, nww, ww, 3, nh, hd)
    qkv = qkv.transpose(0, 1, 3, 5, 6, 2, 4, 7)
    qkv = qkv.reshape(B * nwh * nww, 3, nh, wh * ww, hd)
    q, k, v = qkv[:, 0], qkv[:, 1], qkv[:, 2]
    attn = pallas_window_attention(q, k, v, p["rel_bias"])   # [nW, nh, win, hd]
    attn = attn.reshape(B, nwh, nww, nh, wh, ww, hd)
    attn = attn.transpose(0, 1, 4, 2, 5, 3, 6).reshape(B, Hp, Wp, D)
    if sh or sw:
        attn = jnp.roll(attn, shift=(sh, sw), axis=(1, 2))
    attn = attn.reshape(M, D)
    # residual add fused into the projection kernel epilogue
    tokens = pallas_linear(attn, p["proj_w"], bias=p["proj_b"],
                           residual=shortcut)

    # --- MLP: LN2 + fc1 + GELU + fc2 + residual in ONE kernel ---
    tokens = pallas_mlp(tokens, p["ln2_g"], p["ln2_b"],
                        p["fc1_w"], p["fc1_b"], p["fc2_w"], p["fc2_b"])
    return tokens


def _im2col3x3_nhwc(x):
    """x: [B, H, W, Cin] -> [B*H*W, 9*Cin] ('same' 3x3 patches, tap-major)."""
    B, H, W, Cin = x.shape
    xp = jnp.pad(x, ((0, 0), (1, 1), (1, 1), (0, 0)))
    cols = [xp[:, di:di + H, dj:dj + W, :]
            for di in range(3) for dj in range(3)]
    p = jnp.stack(cols, axis=3)                              # [B,H,W,9,Cin]
    return p.reshape(B * H * W, 9 * Cin)


def swin_denoise_forward(x, params, cfg: SwinConfig):
    B, C, H, W = x.shape
    ph, pw = cfg.patch_size
    assert H % ph == 0 and W % pw == 0
    Hp, Wp = H // ph, W // pw
    D = cfg.embed_dim
    wh = min(cfg.window_size[0], Hp)
    ww = min(cfg.window_size[1], Wp)

    # --- patch embedding: non-overlapping conv == reshape + matmul (+LN) ---
    patches = x.reshape(B, C, Hp, ph, Wp, pw)
    patches = patches.transpose(0, 2, 4, 1, 3, 5).reshape(B * Hp * Wp,
                                                          C * ph * pw)
    tokens = pallas_linear(patches, params["patch_w"], bias=params["patch_b"],
                           ln_out=(params["patch_ln_g"],
                                   params["patch_ln_b"]))

    # --- Swin transformer stages (no downsampling; see TODO above) ---
    blk_idx = 0
    for stage_i, depth in enumerate(cfg.depths):
        nh = cfg.num_heads[stage_i]
        for d in range(depth):
            sh = 0 if (d % 2 == 0 or wh >= Hp) else wh // 2
            sw = 0 if (d % 2 == 0 or ww >= Wp) else ww // 2
            tokens = swin_block(tokens, B, Hp, Wp, params["blocks"][blk_idx],
                                num_heads=nh, window=(wh, ww), shift=(sh, sw))
            blk_idx += 1

    # --- x.transpose(1,2).reshape(B, D, Hp, Wp) + output 3x3 conv ---
    feat = tokens.reshape(B, Hp, Wp, D)                      # NHWC grid
    cols = _im2col3x3_nhwc(feat)                             # [B*Hp*Wp, 9D]
    wmat = params["conv_w"].transpose(2, 3, 1, 0).reshape(9 * D, C)
    # lane-dense orientation: output last dim = B*Hp*Wp, not Cout
    out_t = pallas_linear(wmat.T, cols.T)                    # [Cout, B*Hp*Wp]
    out = out_t.reshape(C, B, Hp, Wp).transpose(1, 0, 2, 3)
    out = out + params["conv_b"].reshape(1, C, 1, 1)
    return out


# ---------------------------------- main -------------------------------------

if __name__ == "__main__":
    key = jax.random.PRNGKey(0)
    k_params, k_x, k_a, k_b, k_c = jax.random.split(key, 5)

    # Small config consistent with SwinDenoise (patch (1,45), window (1,4));
    # H reduced 128->16 and depths (2,6)->(2,2) to keep the demo small.
    cfg = SwinConfig(img_size=(16, 180), in_chans=1, embed_dim=96,
                     depths=(2, 2), num_heads=(3, 6),
                     patch_size=(1, 45), window_size=(1, 4), mlp_ratio=4.0)
    B = 2
    H, W = cfg.img_size
    x = jax.random.normal(k_x, (B, cfg.in_chans, H, W), jnp.float32)
    params = build_params(k_params, cfg)

    # Sanity check: fused LN + linear + GELU (small path) vs XLA reference.
    a = jax.random.normal(k_a, (100, 70), jnp.float32)
    w = jax.random.normal(k_b, (70, 130), jnp.float32)
    bias = 0.1 * jax.random.normal(k_c, (130,), jnp.float32)
    g = jnp.ones((70,), jnp.float32)
    bt = jnp.zeros((70,), jnp.float32)
    got = pallas_linear(a, w, bias=bias, activation="gelu", ln_in=(g, bt))
    mu = a.mean(-1, keepdims=True)
    var = a.var(-1, keepdims=True)
    an = (a - mu) * jax.lax.rsqrt(var + 1e-5)
    want = jax.nn.gelu(
        jnp.dot(an.astype(jnp.bfloat16), w.astype(jnp.bfloat16),
                preferred_element_type=jnp.float32) + bias)
    assert jnp.allclose(got, want, atol=2e-2, rtol=2e-2)

    # Sanity check: generic 3-D tiled matmul fallback vs XLA reference.
    a2 = jax.random.normal(k_a, (200, 260), jnp.float32)
    w2 = jax.random.normal(k_b, (260, 140), jnp.float32)
    got2 = _pallas_matmul_big(a2, w2)
    want2 = jnp.dot(a2.astype(jnp.bfloat16), w2.astype(jnp.bfloat16),
                    preferred_element_type=jnp.float32)
    assert jnp.allclose(got2, want2, atol=2e-2, rtol=2e-2)

    fwd = jax.jit(functools.partial(swin_denoise_forward, cfg=cfg))
    out = fwd(x, params)
    jax.block_until_ready(out)

    Hp, Wp = H // cfg.patch_size[0], W // cfg.patch_size[1]
    assert out.shape == (B, cfg.in_chans, Hp, Wp)
    assert out.dtype == jnp.float32
    assert bool(jnp.all(jnp.isfinite(out)))
    print("KERNEL_OK")
</pallas_src>

<mosaic_0001>
module attributes {stable_mosaic.version = 11 : i64} {
  func.func @_fused_linear_kernel(%arg0: i32, %arg1: memref<104x128xf32, #tpu.memory_space<vmem>>, %arg2: memref<128x256xbf16, #tpu.memory_space<vmem>>, %arg3: memref<1x256xf32, #tpu.memory_space<vmem>>, %arg4: memref<1x128xf32, #tpu.memory_space<vmem>>, %arg5: memref<1x128xf32, #tpu.memory_space<vmem>>, %arg6: memref<104x256xf32, #tpu.memory_space<vmem>>) attributes {dimension_semantics = [#tpu.dimension_semantics<parallel>], iteration_bounds = array<i64: 1>, scalar_prefetch = 0 : i64, scratch_operands = 0 : i64, tpu.core_type = #tpu.core_type<tc>, window_params = [{transform_indices = @transform_0, window_bounds = array<i64: 104, 128>}, {pipeline_mode = #tpu.pipeline_mode<synchronous>, transform_indices = @transform_1, window_bounds = array<i64: 128, 256>}, {pipeline_mode = #tpu.pipeline_mode<synchronous>, transform_indices = @transform_2, window_bounds = array<i64: 1, 256>}, {pipeline_mode = #tpu.pipeline_mode<synchronous>, transform_indices = @transform_3, window_bounds = array<i64: 1, 128>}, {pipeline_mode = #tpu.pipeline_mode<synchronous>, transform_indices = @transform_4, window_bounds = array<i64: 1, 128>}, {transform_indices = @transform_5, window_bounds = array<i64: 104, 256>}]} {
    %c0 = arith.constant 0 : index
    %c0_0 = arith.constant 0 : index
    %0 = vector.load %arg1[%c0, %c0_0] : memref<104x128xf32, #tpu.memory_space<vmem>>, vector<104x128xf32>
    %cst = arith.constant dense<0.000000e+00> : vector<104xf32>
    %1 = vector.multi_reduction <add>, %0, %cst [1] : vector<104x128xf32> to vector<104xf32>
    %2 = vector.shape_cast %1 : vector<104xf32> to vector<104x1xf32>
    %cst_1 = arith.constant 7.000000e+01 : f32
    %3 = vector.broadcast %cst_1 : f32 to vector<104x1xf32>
    %4 = arith.divf %2, %3 : vector<104x1xf32>
    %5 = arith.mulf %0, %0 : vector<104x128xf32>
    %cst_2 = arith.constant dense<0.000000e+00> : vector<104xf32>
    %6 = vector.multi_reduction <add>, %5, %cst_2 [1] : vector<104x128xf32> to vector<104xf32>
    %7 = vector.shape_cast %6 : vector<104xf32> to vector<104x1xf32>
    %cst_3 = arith.constant 7.000000e+01 : f32
    %8 = vector.broadcast %cst_3 : f32 to vector<104x1xf32>
    %9 = arith.divf %7, %8 : vector<104x1xf32>
    %10 = arith.mulf %4, %4 : vector<104x1xf32>
    %11 = arith.subf %9, %10 : vector<104x1xf32>
    %12 = vector.broadcast %4 : vector<104x1xf32> to vector<104x128xf32>
    %13 = arith.subf %0, %12 : vector<104x128xf32>
    %cst_4 = arith.constant 9.99999974E-6 : f32
    %14 = vector.broadcast %cst_4 : f32 to vector<104x1xf32>
    %15 = arith.addf %11, %14 : vector<104x1xf32>
    %16 = math.rsqrt %15 : vector<104x1xf32>
    %17 = vector.broadcast %16 : vector<104x1xf32> to vector<104x128xf32>
    %18 = arith.mulf %13, %17 : vector<104x128xf32>
    %c0_5 = arith.constant 0 : index
    %c0_6 = arith.constant 0 : index
    %19 = vector.load %arg4[%c0_5, %c0_6] : memref<1x128xf32, #tpu.memory_space<vmem>>, vector<1x128xf32>
    %20 = vector.broadcast %19 : vector<1x128xf32> to vector<104x128xf32>
    %21 = arith.mulf %18, %20 : vector<104x128xf32>
    %c0_7 = arith.constant 0 : index
    %c0_8 = arith.constant 0 : index
    %22 = vector.load %arg5[%c0_7, %c0_8] : memref<1x128xf32, #tpu.memory_space<vmem>>, vector<1x128xf32>
    %23 = vector.broadcast %22 : vector<1x128xf32> to vector<104x128xf32>
    %24 = arith.addf %21, %23 : vector<104x128xf32>
    %25 = arith.truncf %24 : vector<104x128xf32> to vector<104x128xbf16>
    %c0_9 = arith.constant 0 : index
    %c0_10 = arith.constant 0 : index
    %26 = vector.load %arg2[%c0_9, %c0_10] : memref<128x256xbf16, #tpu.memory_space<vmem>>, vector<128x256xbf16>
    %cst_11 = arith.constant dense<0.000000e+00> : vector<104x256xf32>
    %27 = tpu.matmul %25, %26, %cst_11 {dimension_numbers = #tpu.dot_dimension_numbers<[1], [0], [0], [1], [0, 0, 1, 1], [], []>} : vector<104x128xbf16>, vector<128x256xbf16>, vector<104x256xf32> -> vector<104x256xf32>
    %c0_12 = arith.constant 0 : index
    %c0_13 = arith.constant 0 : index
    %28 = vector.load %arg3[%c0_12, %c0_13] : memref<1x256xf32, #tpu.memory_space<vmem>>, vector<1x256xf32>
    %29 = vector.broadcast %28 : vector<1x256xf32> to vector<104x256xf32>
    %30 = arith.addf %27, %29 : vector<104x256xf32>
    %31 = arith.mulf %30, %30 : vector<104x256xf32>
    %32 = arith.mulf %30, %31 : vector<104x256xf32>
    %cst_14 = arith.constant 4.471500e-02 : f32
    %33 = vector.broadcast %cst_14 : f32 to vector<104x256xf32>
    %34 = arith.mulf %33, %32 : vector<104x256xf32>
    %35 = arith.addf %30, %34 : vector<104x256xf32>
    %cst_15 = arith.constant 0.797884583 : f32
    %36 = vector.broadcast %cst_15 : f32 to vector<104x256xf32>
    %37 = arith.mulf %36, %35 : vector<104x256xf32>
    %38 = math.tanh %37 : vector<104x256xf32>
    %cst_16 = arith.constant 1.000000e+00 : f32
    %39 = vector.broadcast %cst_16 : f32 to vector<104x256xf32>
    %40 = arith.addf %39, %38 : vector<104x256xf32>
    %cst_17 = arith.constant 5.000000e-01 : f32
    %41 = vector.broadcast %cst_17 : f32 to vector<104x256xf32>
    %42 = arith.mulf %41, %40 : vector<104x256xf32>
    %43 = arith.mulf %30, %42 : vector<104x256xf32>
    %c0_18 = arith.constant 0 : index
    %c0_19 = arith.constant 0 : index
    %44 = vector.load %arg6[%c0_18, %c0_19] : memref<104x256xf32, #tpu.memory_space<vmem>>, vector<104x256xf32>
    tpu.vector_store %arg6[%c0_18, %c0_19], %43 {strides = array<i32>} : memref<104x256xf32, #tpu.memory_space<vmem>>, vector<104x256xf32>,
    return
  }
  func.func @transform_0(%arg0: i32) -> (i32, i32) {
    %c0_i32 = arith.constant 0 : i32
    %c0_i32_0 = arith.constant 0 : i32
    return %arg0, %c0_i32 : i32, i32
  }
  func.func @transform_1(%arg0: i32) -> (i32, i32) {
    %c0_i32 = arith.constant 0 : i32
    %c0_i32_0 = arith.constant 0 : i32
    %c0_i32_1 = arith.constant 0 : i32
    return %c0_i32, %c0_i32_0 : i32, i32
  }
  func.func @transform_2(%arg0: i32) -> (i32, i32) {
    %c0_i32 = arith.constant 0 : i32
    %c0_i32_0 = arith.constant 0 : i32
    %c0_i32_1 = arith.constant 0 : i32
    return %c0_i32, %c0_i32_0 : i32, i32
  }
  func.func @transform_3(%arg0: i32) -> (i32, i32) {
    %c0_i32 = arith.constant 0 : i32
    %c0_i32_0 = arith.constant 0 : i32
    %c0_i32_1 = arith.constant 0 : i32
    return %c0_i32, %c0_i32_0 : i32, i32
  }
  func.func @transform_4(%arg0: i32) -> (i32, i32) {
    %c0_i32 = arith.constant 0 : i32
    %c0_i32_0 = arith.constant 0 : i32
    %c0_i32_1 = arith.constant 0 : i32
    return %c0_i32, %c0_i32_0 : i32, i32
  }
  func.func @transform_5(%arg0: i32) -> (i32, i32) {
    %c0_i32 = arith.constant 0 : i32
    %c0_i32_0 = arith.constant 0 : i32
    return %arg0, %c0_i32 : i32, i32
  }
}

</mosaic_0001>

<llo_original>
// kernel: tpu_custom_call.1
$region0: #{tpu_custom_call.1}
  #allocation0 [shape = 'u32[]', space=smem, size = 0x4, offset = 0x4, fixed_abs, tag = 'smem constant byte address 0x4 - core index']
  #allocation1 [shape = 'u32[72,128]{1,0:T(1,128)}', space=vmem, size = 0x9000, scoped, tag = 'internal scratch']
  %s0 = inlined_call_operand.hbm [shape: f32[104,128], index: 0, kind: input, shape index: {}]
  %s1 = inlined_call_operand.hbm [shape: bf16[128,256], index: 1, kind: input, shape index: {}]
  %s2 = inlined_call_operand.hbm [shape: f32[1,256], index: 2, kind: input, shape index: {}]
  %s3 = inlined_call_operand.vmem [shape: f32[1,128], index: 3, kind: input, shape index: {}]
  %s4 = inlined_call_operand.vmem [shape: f32[1,128], index: 4, kind: input, shape index: {}]
  %s5 = inlined_call_operand.hbm [shape: f32[104,256], index: 5, kind: output, shape index: {}]
  %s6 = sld [smem:[#allocation0]]
  $region42: #{tpu_custom_call.1} parent=0
    _
  %s8 = ssub.s32 1, %s6
  %s9 = scalar_select 0, %s8, %s6
  $region1: #{tpu_custom_call.1} parent=0
    #allocation2 [shape = 'u8[53248]{0}', space=vmem, size = 0xd000, scoped, tag = 'input window, operand 0, single buffered']
    #allocation3 [shape = 's32[1]{0}', space=sflag, size = 0x4, scoped, tag = 'scoped memory for tpu_custom_call.1']
    #allocation4 [shape = 's32[1]{0}', space=sflag, size = 0x4, scoped, tag = 'scoped memory for tpu_custom_call.1']
    #allocation5 [shape = 'u8[65536]{0}', space=vmem, size = 0x10000, scoped, tag = 'input window, operand 1, single buffered']
    #allocation6 [shape = 's32[1]{0}', space=sflag, size = 0x4, scoped, tag = 'scoped memory for tpu_custom_call.1']
    #allocation7 [shape = 'u8[1024]{0}', space=vmem, size = 0x400, scoped, tag = 'input window, operand 2, single buffered']
    #allocation8 [shape = 'u8[106496]{0}', space=vmem, size = 0x1a000, scoped, tag = 'output window, operand 0, single buffered']
    %10 = vsyncpa [#allocation3], 0
    %11 = vsyncpa [#allocation6], 0
    %12 = vsyncpa [#allocation4], 0
    // Predicated region
    $region2: #{tpu_custom_call.1} parent=1 // pred_check
      _
    $region3: #{tpu_custom_call.1} parent=1 // pred_check_branch
      %14 = sbr.rel (0) target = $region5
    $region4: #{tpu_custom_call.1} parent=1 // pred_region
      %16 = vsyncadd [#allocation3], 0
      %s17 = sshll.u32 %s0, 4
      %s18 = int_to_ptr.hbm [resolvable:$true] %s17
      %s19 = sshll.u32 [#allocation2], 4
      %s20 = int_to_ptr.vmem [resolvable:$true] %s19
      %25 = dma.hbm_to_vmem [thread:$0]  %s18, 1664, %s20, [#allocation3], 128, 128, 8
    $region5: #{tpu_custom_call.1} parent=1 // pred_fallthru
      _
    // Predicated region
    $region6: #{tpu_custom_call.1} parent=1 // pred_check
      _
    $region7: #{tpu_custom_call.1} parent=1 // pred_check_branch
      %27 = sbr.rel (0) target = $region9
    $region8: #{tpu_custom_call.1} parent=1 // pred_region
      %29 = vsyncadd [#allocation6], 0
      %s30 = sshll.u32 %s1, 4
      %s31 = int_to_ptr.hbm [resolvable:$true] %s30
      %s32 = sshll.u32 [#allocation5], 4
      %s33 = int_to_ptr.vmem [resolvable:$true] %s32
      %38 = dma.hbm_to_vmem [thread:$0]  %s31, 2048, %s33, [#allocation6], 128, 128, 8
    $region9: #{tpu_custom_call.1} parent=1 // pred_fallthru
      _
    // Predicated region
    $region10: #{tpu_custom_call.1} parent=1 // pred_check
      _
    $region11: #{tpu_custom_call.1} parent=1 // pred_check_branch
      %40 = sbr.rel (0) target = $region13
    $region12: #{tpu_custom_call.1} parent=1 // pred_region
      %42 = vsyncadd [#allocation6], 0
      %s44 = sshll.u32 %s2, 4
      %s45 = int_to_ptr.hbm [resolvable:$true] %s44
      %s46 = sshll.u32 [#allocation7], 4
      %s47 = int_to_ptr.vmem [resolvable:$true] %s46
      %49 = dma.hbm_to_vmem [thread:$0]  %s45, 32, %s47, [#allocation6]
    $region13: #{tpu_custom_call.1} parent=1 // pred_fallthru
      _
    // Predicated region
    $region14: #{tpu_custom_call.1} parent=1 // pred_check
      _
    $region15: #{tpu_custom_call.1} parent=1 // pred_check_branch
      %51 = sbr.rel (0) target = $region17
    $region16: #{tpu_custom_call.1} parent=1 // pred_region
      _
    $region17: #{tpu_custom_call.1} parent=1 // pred_fallthru
      _
    // Predicated region
    $region18: #{tpu_custom_call.1} parent=1 // pred_check
      _
    $region19: #{tpu_custom_call.1} parent=1 // pred_check_branch
      %53 = sbr.rel (0) target = $region21
    $region20: #{tpu_custom_call.1} parent=1 // pred_region
      _
    $region21: #{tpu_custom_call.1} parent=1 // pred_fallthru
      _
    // Predicated region
    $region22: #{tpu_custom_call.1} parent=1 // pred_check
      _
    $region23: #{tpu_custom_call.1} parent=1 // pred_check_branch
      %55 = sbr.rel (0) target = $region25
    $region24: #{tpu_custom_call.1} parent=1 // pred_region
      %57 = dma.done [#allocation3], 1664
    $region25: #{tpu_custom_call.1} parent=1 // pred_fallthru
      _
    // Predicated region
    $region26: #{tpu_custom_call.1} parent=1 // pred_check
      _
    $region27: #{tpu_custom_call.1} parent=1 // pred_check_branch
      %59 = sbr.rel (0) target = $region29
    $region28: #{tpu_custom_call.1} parent=1 // pred_region
      %61 = dma.done [#allocation6], 2048
    $region29: #{tpu_custom_call.1} parent=1 // pred_fallthru
      _
    // Predicated region
    $region30: #{tpu_custom_call.1} parent=1 // pred_check
      _
    $region31: #{tpu_custom_call.1} parent=1 // pred_check_branch
      %63 = sbr.rel (0) target = $region33
    $region32: #{tpu_custom_call.1} parent=1 // pred_region
      %65 = dma.done [#allocation6], 32
    $region33: #{tpu_custom_call.1} parent=1 // pred_fallthru
      _
    %v66 = vld [vmem:[#allocation2] sm:$0xff]
    %v67 = vld [vmem:[#allocation2 + $0x8] sm:$0xff]
    %v68 = vld [vmem:[#allocation2 + $0x10] sm:$0xff]
    %v69 = vld [vmem:[#allocation2 + $0x18] sm:$0xff]
    %v70 = vld [vmem:[#allocation2 + $0x20] sm:$0xff]
    %v71 = vld [vmem:[#allocation2 + $0x28] sm:$0xff]
    %v72 = vld [vmem:[#allocation2 + $0x30] sm:$0xff]
    %v73 = vld [vmem:[#allocation2 + $0x38] sm:$0xff]
    %v74 = vld [vmem:[#allocation2 + $0x40] sm:$0xff]
    %v75 = vld [vmem:[#allocation2 + $0x48] sm:$0xff]
    %v76 = vld [vmem:[#allocation2 + $0x50] sm:$0xff]
    %v77 = vld [vmem:[#allocation2 + $0x58] sm:$0xff]
    %v78 = vld [vmem:[#allocation2 + $0x60] sm:$0xff]
    %79 = vadd.xlane.f32.xlu0 %v66
    %v80 = vpop.xlane.xlu0 %79
    %81 = vadd.xlane.f32.xlu0 %v67
    %v82 = vpop.xlane.xlu0 %81
    %83 = vadd.xlane.f32.xlu0 %v68
    %v84 = vpop.xlane.xlu0 %83
    %85 = vadd.xlane.f32.xlu0 %v69
    %v86 = vpop.xlane.xlu0 %85
    %87 = vadd.xlane.f32.xlu0 %v70
    %v88 = vpop.xlane.xlu0 %87
    %89 = vadd.xlane.f32.xlu0 %v71
    %v90 = vpop.xlane.xlu0 %89
    %91 = vadd.xlane.f32.xlu0 %v72
    %v92 = vpop.xlane.xlu0 %91
    %93 = vadd.xlane.f32.xlu0 %v73
    %v94 = vpop.xlane.xlu0 %93
    %95 = vadd.xlane.f32.xlu0 %v74
    %v96 = vpop.xlane.xlu0 %95
    %97 = vadd.xlane.f32.xlu0 %v75
    %v98 = vpop.xlane.xlu0 %97
    %99 = vadd.xlane.f32.xlu0 %v76
    %v100 = vpop.xlane.xlu0 %99
    %101 = vadd.xlane.f32.xlu0 %v77
    %v102 = vpop.xlane.xlu0 %101
    %103 = vadd.xlane.f32.xlu0 %v78
    %v104 = vpop.xlane.xlu0 %103
    %v105 = vrcp.pop 70.0
    %v106 = vmul.f32 70.0, %v105
    %v107 = vsub.f32 1.0, %v106
    %v108 = vmul.f32 %v105, %v107
    %v109 = vadd.f32 %v105, %v108
    %vm110 = vweird.f32 %v105
    %v111 = vsel %vm110, %v105, %v109
    %v112 = vmul.f32 %v80, %v111
    %v113 = vmul.f32 %v82, %v111
    %v114 = vmul.f32 %v84, %v111
    %v115 = vmul.f32 %v86, %v111
    %v116 = vmul.f32 %v88, %v111
    %v117 = vmul.f32 %v90, %v111
    %v118 = vmul.f32 %v92, %v111
    %v119 = vmul.f32 %v94, %v111
    %v120 = vmul.f32 %v96, %v111
    %v121 = vmul.f32 %v98, %v111
    %v122 = vmul.f32 %v100, %v111
    %v123 = vmul.f32 %v102, %v111
    %v124 = vmul.f32 %v104, %v111
    %v125 = vmul.f32 %v66, %v66
    %v126 = vmul.f32 %v67, %v67
    %v127 = vmul.f32 %v68, %v68
    %v128 = vmul.f32 %v69, %v69
    %v129 = vmul.f32 %v70, %v70
    %v130 = vmul.f32 %v71, %v71
    %v131 = vmul.f32 %v72, %v72
    %v132 = vmul.f32 %v73, %v73
    %v133 = vmul.f32 %v74, %v74
    %v134 = vmul.f32 %v75, %v75
    %v135 = vmul.f32 %v76, %v76
    %v136 = vmul.f32 %v77, %v77
    %v137 = vmul.f32 %v78, %v78
    %138 = vadd.xlane.f32.xlu0 %v125
    %v139 = vpop.xlane.xlu0 %138
    %140 = vadd.xlane.f32.xlu0 %v126
    %v141 = vpop.xlane.xlu0 %140
    %142 = vadd.xlane.f32.xlu0 %v127
    %v143 = vpop.xlane.xlu0 %142
    %144 = vadd.xlane.f32.xlu0 %v128
    %v145 = vpop.xlane.xlu0 %144
    %146 = vadd.xlane.f32.xlu0 %v129
    %v147 = vpop.xlane.xlu0 %146
    %148 = vadd.xlane.f32.xlu0 %v130
    %v149 = vpop.xlane.xlu0 %148
    %150 = vadd.xlane.f32.xlu0 %v131
    %v151 = vpop.xlane.xlu0 %150
    %152 = vadd.xlane.f32.xlu0 %v132
    %v153 = vpop.xlane.xlu0 %152
    %154 = vadd.xlane.f32.xlu0 %v133
    %v155 = vpop.xlane.xlu0 %154
    %156 = vadd.xlane.f32.xlu0 %v134
    %v157 = vpop.xlane.xlu0 %156
    %158 = vadd.xlane.f32.xlu0 %v135
    %v159 = vpop.xlane.xlu0 %158
    %160 = vadd.xlane.f32.xlu0 %v136
    %v161 = vpop.xlane.xlu0 %160
    %162 = vadd.xlane.f32.xlu0 %v137
    %v163 = vpop.xlane.xlu0 %162
    %v164 = vmul.f32 %v139, %v111
    %v165 = vmul.f32 %v141, %v111
    %v166 = vmul.f32 %v143, %v111
    %v167 = vmul.f32 %v145, %v111
    %v168 = vmul.f32 %v147, %v111
    %v169 = vmul.f32 %v149, %v111
    %v170 = vmul.f32 %v151, %v111
    %v171 = vmul.f32 %v153, %v111
    %v172 = vmul.f32 %v155, %v111
    %v173 = vmul.f32 %v157, %v111
    %v174 = vmul.f32 %v159, %v111
    %v175 = vmul.f32 %v161, %v111
    %v176 = vmul.f32 %v163, %v111
    %v177 = vmul.f32 %v112, %v112
    %v178 = vmul.f32 %v113, %v113
    %v179 = vmul.f32 %v114, %v114
    %v180 = vmul.f32 %v115, %v115
    %v181 = vmul.f32 %v116, %v116
    %v182 = vmul.f32 %v117, %v117
    %v183 = vmul.f32 %v118, %v118
    %v184 = vmul.f32 %v119, %v119
    %v185 = vmul.f32 %v120, %v120
    %v186 = vmul.f32 %v121, %v121
    %v187 = vmul.f32 %v122, %v122
    %v188 = vmul.f32 %v123, %v123
    %v189 = vmul.f32 %v124, %v124
    %v190 = vsub.f32 %v164, %v177
    %v191 = vsub.f32 %v165, %v178
    %v192 = vsub.f32 %v166, %v179
    %v193 = vsub.f32 %v167, %v180
    %v194 = vsub.f32 %v168, %v181
    %v195 = vsub.f32 %v169, %v182
    %v196 = vsub.f32 %v170, %v183
    %v197 = vsub.f32 %v171, %v184
    %v198 = vsub.f32 %v172, %v185
    %v199 = vsub.f32 %v173, %v186
    %v200 = vsub.f32 %v174, %v187
    %v201 = vsub.f32 %v175, %v188
    %v202 = vsub.f32 %v176, %v189
    %v203 = vsub.f32 %v66, %v112
    %v204 = vsub.f32 %v67, %v113
    %v205 = vsub.f32 %v68, %v114
    %v206 = vsub.f32 %v69, %v115
    %v207 = vsub.f32 %v70, %v116
    %v208 = vsub.f32 %v71, %v117
    %v209 = vsub.f32 %v72, %v118
    %v210 = vsub.f32 %v73, %v119
    %v211 = vsub.f32 %v74, %v120
    %v212 = vsub.f32 %v75, %v121
    %v213 = vsub.f32 %v76, %v122
    %v214 = vsub.f32 %v77, %v123
    %v215 = vsub.f32 %v78, %v124
    %v216 = vadd.f32 %v190, 1e-05
    %v217 = vadd.f32 %v191, 1e-05
    %v218 = vadd.f32 %v192, 1e-05
    %v219 = vadd.f32 %v193, 1e-05
    %v220 = vadd.f32 %v194, 1e-05
    %v221 = vadd.f32 %v195, 1e-05
    %v222 = vadd.f32 %v196, 1e-05
    %v223 = vadd.f32 %v197, 1e-05
    %v224 = vadd.f32 %v198, 1e-05
    %v225 = vadd.f32 %v199, 1e-05
    %v226 = vadd.f32 %v200, 1e-05
    %v227 = vadd.f32 %v201, 1e-05
    %v228 = vadd.f32 %v202, 1e-05
    %v229 = vrsqrt.pop %v216
    %v230 = vmul.f32 %v229, %v216
    %v231 = vmul.f32 %v230, %v229
    %v232 = vmul.f32 0.5, %v231
    %v233 = vsub.f32 1.5, %v232
    %v234 = vmul.f32 %v229, %v233
    %vm235 = vweird.f32 %v216
    %vm236 = vweird.f32 %v229
    %vm237 = vmor %vm235, %vm236
    %v238 = vsel %vm237, %v229, %v234
    %v239 = vrsqrt.pop %v217
    %v240 = vmul.f32 %v239, %v217
    %v241 = vmul.f32 %v240, %v239
    %v242 = vmul.f32 0.5, %v241
    %v243 = vsub.f32 1.5, %v242
    %v244 = vmul.f32 %v239, %v243
    %vm245 = vweird.f32 %v217
    %vm246 = vweird.f32 %v239
    %vm247 = vmor %vm245, %vm246
    %v248 = vsel %vm247, %v239, %v244
    %v249 = vrsqrt.pop %v218
    %v250 = vmul.f32 %v249, %v218
    %v251 = vmul.f32 %v250, %v249
    %v252 = vmul.f32 0.5, %v251
    %v253 = vsub.f32 1.5, %v252
    %v254 = vmul.f32 %v249, %v253
    %vm255 = vweird.f32 %v218
    %vm256 = vweird.f32 %v249
    %vm257 = vmor %vm255, %vm256
    %v258 = vsel %vm257, %v249, %v254
    %v259 = vrsqrt.pop %v219
    %v260 = vmul.f32 %v259, %v219
    %v261 = vmul.f32 %v260, %v259
    %v262 = vmul.f32 0.5, %v261
    %v263 = vsub.f32 1.5, %v262
    %v264 = vmul.f32 %v259, %v263
    %vm265 = vweird.f32 %v219
    %vm266 = vweird.f32 %v259
    %vm267 = vmor %vm265, %vm266
    %v268 = vsel %vm267, %v259, %v264
    %v269 = vrsqrt.pop %v220
    %v270 = vmul.f32 %v269, %v220
    %v271 = vmul.f32 %v270, %v269
    %v272 = vmul.f32 0.5, %v271
    %v273 = vsub.f32 1.5, %v272
    %v274 = vmul.f32 %v269, %v273
    %vm275 = vweird.f32 %v220
    %vm276 = vweird.f32 %v269
    %vm277 = vmor %vm275, %vm276
    %v278 = vsel %vm277, %v269, %v274
    %v279 = vrsqrt.pop %v221
    %v280 = vmul.f32 %v279, %v221
    %v281 = vmul.f32 %v280, %v279
    %v282 = vmul.f32 0.5, %v281
    %v283 = vsub.f32 1.5, %v282
    %v284 = vmul.f32 %v279, %v283
    %vm285 = vweird.f32 %v221
    %vm286 = vweird.f32 %v279
    %vm287 = vmor %vm285, %vm286
    %v288 = vsel %vm287, %v279, %v284
    %v289 = vrsqrt.pop %v222
    %v290 = vmul.f32 %v289, %v222
    %v291 = vmul.f32 %v290, %v289
    %v292 = vmul.f32 0.5, %v291
    %v293 = vsub.f32 1.5, %v292
    %v294 = vmul.f32 %v289, %v293
    %vm295 = vweird.f32 %v222
    %vm296 = vweird.f32 %v289
    %vm297 = vmor %vm295, %vm296
    %v298 = vsel %vm297, %v289, %v294
    %v299 = vrsqrt.pop %v223
    %v300 = vmul.f32 %v299, %v223
    %v301 = vmul.f32 %v300, %v299
    %v302 = vmul.f32 0.5, %v301
    %v303 = vsub.f32 1.5, %v302
    %v304 = vmul.f32 %v299, %v303
    %vm305 = vweird.f32 %v223
    %vm306 = vweird.f32 %v299
    %vm307 = vmor %vm305, %vm306
    %v308 = vsel %vm307, %v299, %v304
    %v309 = vrsqrt.pop %v224
    %v310 = vmul.f32 %v309, %v224
    %v311 = vmul.f32 %v310, %v309
    %v312 = vmul.f32 0.5, %v311
    %v313 = vsub.f32 1.5, %v312
    %v314 = vmul.f32 %v309, %v313
    %vm315 = vweird.f32 %v224
    %vm316 = vweird.f32 %v309
    %vm317 = vmor %vm315, %vm316
    %v318 = vsel %vm317, %v309, %v314
    %v319 = vrsqrt.pop %v225
    %v320 = vmul.f32 %v319, %v225
    %v321 = vmul.f32 %v320, %v319
    %v322 = vmul.f32 0.5, %v321
    %v323 = vsub.f32 1.5, %v322
    %v324 = vmul.f32 %v319, %v323
    %vm325 = vweird.f32 %v225
    %vm326 = vweird.f32 %v319
    %vm327 = vmor %vm325, %vm326
    %v328 = vsel %vm327, %v319, %v324
    %v329 = vrsqrt.pop %v226
    %v330 = vmul.f32 %v329, %v226
    %v331 = vmul.f32 %v330, %v329
    %v332 = vmul.f32 0.5, %v331
    %v333 = vsub.f32 1.5, %v332
    %v334 = vmul.f32 %v329, %v333
    %vm335 = vweird.f32 %v226
    %vm336 = vweird.f32 %v329
    %vm337 = vmor %vm335, %vm336
    %v338 = vsel %vm337, %v329, %v334
    %v339 = vrsqrt.pop %v227
    %v340 = vmul.f32 %v339, %v227
    %v341 = vmul.f32 %v340, %v339
    %v342 = vmul.f32 0.5, %v341
    %v343 = vsub.f32 1.5, %v342
    %v344 = vmul.f32 %v339, %v343
    %vm345 = vweird.f32 %v227
    %vm346 = vweird.f32 %v339
    %vm347 = vmor %vm345, %vm346
    %v348 = vsel %vm347, %v339, %v344
    %v349 = vrsqrt.pop %v228
    %v350 = vmul.f32 %v349, %v228
    %v351 = vmul.f32 %v350, %v349
    %v352 = vmul.f32 0.5, %v351
    %v353 = vsub.f32 1.5, %v352
    %v354 = vmul.f32 %v349, %v353
    %vm355 = vweird.f32 %v228
    %vm356 = vweird.f32 %v349
    %vm357 = vmor %vm355, %vm356
    %v358 = vsel %vm357, %v349, %v354
    %v359 = vmul.f32 %v203, %v238
    %v360 = vmul.f32 %v204, %v248
    %v361 = vmul.f32 %v205, %v258
    %v362 = vmul.f32 %v206, %v268
    %v363 = vmul.f32 %v207, %v278
    %v364 = vmul.f32 %v208, %v288
    %v365 = vmul.f32 %v209, %v298
    %v366 = vmul.f32 %v210, %v308
    %v367 = vmul.f32 %v211, %v318
    %v368 = vmul.f32 %v212, %v328
    %v369 = vmul.f32 %v213, %v338
    %v370 = vmul.f32 %v214, %v348
    %v371 = vmul.f32 %v215, %v358
    %v372 = vld [vmem:[%s3] sm:$0x1]
    %v374 = vperm.slane %v372, 0
    %v376 = vmul.f32 %v359, %v374
    %v377 = vmul.f32 %v360, %v374
    %v378 = vmul.f32 %v361, %v374
    %v379 = vmul.f32 %v362, %v374
    %v380 = vmul.f32 %v363, %v374
    %v381 = vmul.f32 %v364, %v374
    %v382 = vmul.f32 %v365, %v374
    %v383 = vmul.f32 %v366, %v374
    %v384 = vmul.f32 %v367, %v374
    %v385 = vmul.f32 %v368, %v374
    %v386 = vmul.f32 %v369, %v374
    %v387 = vmul.f32 %v370, %v374
    %v388 = vmul.f32 %v371, %v374
    %v389 = vld [vmem:[%s4] sm:$0x1]
    %v391 = vperm.slane %v389, 0
    %v393 = vadd.f32 %v376, %v391
    %v394 = vadd.f32 %v377, %v391
    %v395 = vadd.f32 %v378, %v391
    %v396 = vadd.f32 %v379, %v391
    %v397 = vadd.f32 %v380, %v391
    %v398 = vadd.f32 %v381, %v391
    %v399 = vadd.f32 %v382, %v391
    %v400 = vadd.f32 %v383, %v391
    %v401 = vadd.f32 %v384, %v391
    %v402 = vadd.f32 %v385, %v391
    %v403 = vadd.f32 %v386, %v391
    %v404 = vadd.f32 %v387, %v391
    %v405 = vadd.f32 %v388, %v391
    %v406 = vpack.c.bf16 %v394, %v393
    %v407 = vpack.c.bf16 %v396, %v395
    %v408 = vpack.c.bf16 %v398, %v397
    %v409 = vpack.c.bf16 %v400, %v399
    %v410 = vpack.c.bf16 %v402, %v401
    %v411 = vpack.c.bf16 %v404, %v403
    %v412 = vpack.c.bf16 %v405, %v405
    %v413 = vld [vmem:[#allocation5] sm:$0xff]
    %v414 = vld [vmem:[#allocation5 + $0x8] sm:$0xff]
    %v415 = vld [vmem:[#allocation5 + $0x10] sm:$0xff]
    %v416 = vld [vmem:[#allocation5 + $0x18] sm:$0xff]
    %v417 = vld [vmem:[#allocation5 + $0x20] sm:$0xff]
    %v418 = vld [vmem:[#allocation5 + $0x28] sm:$0xff]
    %v419 = vld [vmem:[#allocation5 + $0x30] sm:$0xff]
    %v420 = vld [vmem:[#allocation5 + $0x38] sm:$0xff]
    %v421 = vld [vmem:[#allocation5 + $0x40] sm:$0xff]
    %v422 = vld [vmem:[#allocation5 + $0x48] sm:$0xff]
    %v423 = vld [vmem:[#allocation5 + $0x50] sm:$0xff]
    %v424 = vld [vmem:[#allocation5 + $0x58] sm:$0xff]
    %v425 = vld [vmem:[#allocation5 + $0x60] sm:$0xff]
    %v426 = vld [vmem:[#allocation5 + $0x68] sm:$0xff]
    %v427 = vld [vmem:[#allocation5 + $0x70] sm:$0xff]
    %v428 = vld [vmem:[#allocation5 + $0x78] sm:$0xff]
    %v429 = vld [vmem:[#allocation7] sm:$0x3]
    %v431 = vperm.slane %v429, 0
    %v432 = vperm.slane %v429, 1
    %v451 = vunpack.c.l.b16 %v413
    %v452 = vunpack.c.h.b16 %v413
    %v453 = vunpack.c.l.b16 %v414
    %v454 = vunpack.c.h.b16 %v414
    %v455 = vunpack.c.l.b16 %v415
    %v456 = vunpack.c.h.b16 %v415
    %v457 = vunpack.c.l.b16 %v416
    %v458 = vunpack.c.h.b16 %v416
    %v459 = vunpack.c.l.b16 %v417
    %v460 = vunpack.c.h.b16 %v417
    %v461 = vunpack.c.l.b16 %v418
    %v462 = vunpack.c.h.b16 %v418
    %v463 = vunpack.c.l.b16 %v419
    %v464 = vunpack.c.h.b16 %v419
    %v465 = vunpack.c.l.b16 %v420
    %v466 = vunpack.c.h.b16 %v420
    %v467 = vunpack.c.l.b16 %v421
    %v468 = vunpack.c.h.b16 %v421
    %v469 = vunpack.c.l.b16 %v422
    %v470 = vunpack.c.h.b16 %v422
    %v471 = vunpack.c.l.b16 %v423
    %v472 = vunpack.c.h.b16 %v423
    %v473 = vunpack.c.l.b16 %v424
    %v474 = vunpack.c.h.b16 %v424
    %v475 = vunpack.c.l.b16 %v425
    %v476 = vunpack.c.h.b16 %v425
    %v477 = vunpack.c.l.b16 %v426
    %v478 = vunpack.c.h.b16 %v426
    %v479 = vunpack.c.l.b16 %v427
    %v480 = vunpack.c.h.b16 %v427
    %v481 = vunpack.c.l.b16 %v428
    %v482 = vunpack.c.h.b16 %v428
    %v483 = vpack.c.b16 %v453, %v451
    %v484 = vpack.c.b16 %v454, %v452
    %v485 = vpack.c.b16 %v457, %v455
    %v486 = vpack.c.b16 %v458, %v456
    %v487 = vpack.c.b16 %v461, %v459
    %v488 = vpack.c.b16 %v462, %v460
    %v489 = vpack.c.b16 %v465, %v463
    %v490 = vpack.c.b16 %v466, %v464
    %v491 = vpack.c.b16 %v469, %v467
    %v492 = vpack.c.b16 %v470, %v468
    %v493 = vpack.c.b16 %v473, %v471
    %v494 = vpack.c.b16 %v474, %v472
    %v495 = vpack.c.b16 %v477, %v475
    %v496 = vpack.c.b16 %v478, %v476
    %v497 = vpack.c.b16 %v481, %v479
    %v498 = vpack.c.b16 %v482, %v480
    %515 = vmatpush.bf16.msra.mxu0 %v497
    %516 = vmatpush.bf16.msra.mxu0 %v495
    %517 = vmatpush.bf16.msra.mxu0 %v493
    %518 = vmatpush.bf16.msra.mxu0 %v491
    %519 = vmatpush.bf16.msra.mxu0 %v489
    %520 = vmatpush.bf16.msra.mxu0 %v487
    %521 = vmatpush.bf16.msra.mxu0 %v485
    %522 = vmatpush.bf16.msra.mxu0 %v483
    %523 = vmatmul.bf16.gmra.mxu0 %v406
    %v524 = vpop.f32.mrf.mxu0
    %v525 = vadd.f32 %v431, %v524
    %v526 = vpop.f32.mrf.mxu0
    %v527 = vadd.f32 %v431, %v526
    %528 = vmatmul.bf16.gmra.mxu0 %v407
    %v529 = vpop.f32.mrf.mxu0
    %v530 = vadd.f32 %v431, %v529
    %v531 = vpop.f32.mrf.mxu0
    %v532 = vadd.f32 %v431, %v531
    %533 = vmatmul.bf16.gmra.mxu0 %v408
    %v534 = vpop.f32.mrf.mxu0
    %v535 = vadd.f32 %v431, %v534
    %v536 = vpop.f32.mrf.mxu0
    %v537 = vadd.f32 %v431, %v536
    %538 = vmatmul.bf16.gmra.mxu0 %v409
    %v539 = vpop.f32.mrf.mxu0
    %v540 = vadd.f32 %v431, %v539
    %v541 = vpop.f32.mrf.mxu0
    %v542 = vadd.f32 %v431, %v541
    %543 = vmatmul.bf16.gmra.mxu0 %v410
    %v544 = vpop.f32.mrf.mxu0
    %v545 = vadd.f32 %v431, %v544
    %v546 = vpop.f32.mrf.mxu0
    %v547 = vadd.f32 %v431, %v546
    %548 = vmatmul.bf16.gmra.mxu0 %v411
    %v549 = vpop.f32.mrf.mxu0
    %v550 = vadd.f32 %v431, %v549
    %v551 = vpop.f32.mrf.mxu0
    %v552 = vadd.f32 %v431, %v551
    %553 = vmatmul.bf16.gmra.mxu0 %v412
    %v554 = vpop.f32.mrf.mxu0
    %v555 = vadd.f32 %v431, %v554
    %v556 = vpop.f32.mrf.mxu0
    %557 = vdwg.mxu0
    %558 = vmatpush.bf16.msra.mxu0 %v498
    %559 = vmatpush.bf16.msra.mxu0 %v496
    %560 = vmatpush.bf16.msra.mxu0 %v494
    %561 = vmatpush.bf16.msra.mxu0 %v492
    %562 = vmatpush.bf16.msra.mxu0 %v490
    %563 = vmatpush.bf16.msra.mxu0 %v488
    %564 = vmatpush.bf16.msra.mxu0 %v486
    %565 = vmatpush.bf16.msra.mxu0 %v484
    %566 = vmatmul.bf16.gmra.mxu0 %v406
    %v567 = vpop.f32.mrf.mxu0
    %v568 = vadd.f32 %v432, %v567
    %v569 = vpop.f32.mrf.mxu0
    %v570 = vadd.f32 %v432, %v569
    %571 = vmatmul.bf16.gmra.mxu0 %v407
    %v572 = vpop.f32.mrf.mxu0
    %v573 = vadd.f32 %v432, %v572
    %v574 = vpop.f32.mrf.mxu0
    %v575 = vadd.f32 %v432, %v574
    %576 = vmatmul.bf16.gmra.mxu0 %v408
    %v577 = vpop.f32.mrf.mxu0
    %v578 = vadd.f32 %v432, %v577
    %v579 = vpop.f32.mrf.mxu0
    %v580 = vadd.f32 %v432, %v579
    %581 = vmatmul.bf16.gmra.mxu0 %v409
    %v582 = vpop.f32.mrf.mxu0
    %v583 = vadd.f32 %v432, %v582
    %v584 = vpop.f32.mrf.mxu0
    %v585 = vadd.f32 %v432, %v584
    %586 = vmatmul.bf16.gmra.mxu0 %v410
    %v587 = vpop.f32.mrf.mxu0
    %v588 = vadd.f32 %v432, %v587
    %v589 = vpop.f32.mrf.mxu0
    %v590 = vadd.f32 %v432, %v589
    %591 = vmatmul.bf16.gmra.mxu0 %v411
    %v592 = vpop.f32.mrf.mxu0
    %v593 = vadd.f32 %v432, %v592
    %v594 = vpop.f32.mrf.mxu0
    %v595 = vadd.f32 %v432, %v594
    %596 = vmatmul.bf16.gmra.mxu0 %v412
    %v597 = vpop.f32.mrf.mxu0
    %v598 = vadd.f32 %v432, %v597
    %v599 = vpop.f32.mrf.mxu0
    %600 = vdwg.mxu0
    %v601 = vmul.f32 %v525, %v525
    %v602 = vmul.f32 %v568, %v568
    %v603 = vmul.f32 %v527, %v527
    %v604 = vmul.f32 %v570, %v570
    %v605 = vmul.f32 %v530, %v530
    %v606 = vmul.f32 %v573, %v573
    %v607 = vmul.f32 %v532, %v532
    %v608 = vmul.f32 %v575, %v575
    %v609 = vmul.f32 %v535, %v535
    %v610 = vmul.f32 %v578, %v578
    %v611 = vmul.f32 %v537, %v537
    %v612 = vmul.f32 %v580, %v580
    %v613 = vmul.f32 %v540, %v540
    %v614 = vmul.f32 %v583, %v583
    %v615 = vmul.f32 %v542, %v542
    %v616 = vmul.f32 %v585, %v585
    %v617 = vmul.f32 %v545, %v545
    %v618 = vmul.f32 %v588, %v588
    %v619 = vmul.f32 %v547, %v547
    %v620 = vmul.f32 %v590, %v590
    %v621 = vmul.f32 %v550, %v550
    %v622 = vmul.f32 %v593, %v593
    %v623 = vmul.f32 %v552, %v552
    %v624 = vmul.f32 %v595, %v595
    %v625 = vmul.f32 %v555, %v555
    %v626 = vmul.f32 %v598, %v598
    %v627 = vmul.f32 %v525, %v601
    %v628 = vmul.f32 %v568, %v602
    %v629 = vmul.f32 %v527, %v603
    %v630 = vmul.f32 %v570, %v604
    %v631 = vmul.f32 %v530, %v605
    %v632 = vmul.f32 %v573, %v606
    %v633 = vmul.f32 %v532, %v607
    %v634 = vmul.f32 %v575, %v608
    %v635 = vmul.f32 %v535, %v609
    %v636 = vmul.f32 %v578, %v610
    %v637 = vmul.f32 %v537, %v611
    %v638 = vmul.f32 %v580, %v612
    %v639 = vmul.f32 %v540, %v613
    %v640 = vmul.f32 %v583, %v614
    %v641 = vmul.f32 %v542, %v615
    %v642 = vmul.f32 %v585, %v616
    %v643 = vmul.f32 %v545, %v617
    %v644 = vmul.f32 %v588, %v618
    %v645 = vmul.f32 %v547, %v619
    %v646 = vmul.f32 %v590, %v620
    %v647 = vmul.f32 %v550, %v621
    %v648 = vmul.f32 %v593, %v622
    %v649 = vmul.f32 %v552, %v623
    %v650 = vmul.f32 %v595, %v624
    %v651 = vmul.f32 %v555, %v625
    %v652 = vmul.f32 %v598, %v626
    %v653 = vmul.f32 %v627, 0.044715
    %v654 = vmul.f32 %v628, 0.044715
    %v655 = vmul.f32 %v629, 0.044715
    %v656 = vmul.f32 %v630, 0.044715
    %v657 = vmul.f32 %v631, 0.044715
    %v658 = vmul.f32 %v632, 0.044715
    %v659 = vmul.f32 %v633, 0.044715
    %v660 = vmul.f32 %v634, 0.044715
    %v661 = vmul.f32 %v635, 0.044715
    %v662 = vmul.f32 %v636, 0.044715
    %v663 = vmul.f32 %v637, 0.044715
    %v664 = vmul.f32 %v638, 0.044715
    %v665 = vmul.f32 %v639, 0.044715
    %v666 = vmul.f32 %v640, 0.044715
    %v667 = vmul.f32 %v641, 0.044715
    %v668 = vmul.f32 %v642, 0.044715
    %v669 = vmul.f32 %v643, 0.044715
    %v670 = vmul.f32 %v644, 0.044715
    %v671 = vmul.f32 %v645, 0.044715
    %v672 = vmul.f32 %v646, 0.044715
    %v673 = vmul.f32 %v647, 0.044715
    %v674 = vmul.f32 %v648, 0.044715
    %v675 = vmul.f32 %v649, 0.044715
    %v676 = vmul.f32 %v650, 0.044715
    %v677 = vmul.f32 %v651, 0.044715
    %v678 = vmul.f32 %v652, 0.044715
    %v679 = vadd.f32 %v525, %v653
    %v680 = vadd.f32 %v568, %v654
    %v681 = vadd.f32 %v527, %v655
    %v682 = vadd.f32 %v570, %v656
    %v683 = vadd.f32 %v530, %v657
    %v684 = vadd.f32 %v573, %v658
    %v685 = vadd.f32 %v532, %v659
    %v686 = vadd.f32 %v575, %v660
    %v687 = vadd.f32 %v535, %v661
    %v688 = vadd.f32 %v578, %v662
    %v689 = vadd.f32 %v537, %v663
    %v690 = vadd.f32 %v580, %v664
    %v691 = vadd.f32 %v540, %v665
    %v692 = vadd.f32 %v583, %v666
    %v693 = vadd.f32 %v542, %v667
    %v694 = vadd.f32 %v585, %v668
    %v695 = vadd.f32 %v545, %v669
    %v696 = vadd.f32 %v588, %v670
    %v697 = vadd.f32 %v547, %v671
    %v698 = vadd.f32 %v590, %v672
    %v699 = vadd.f32 %v550, %v673
    %v700 = vadd.f32 %v593, %v674
    %v701 = vadd.f32 %v552, %v675
    %v702 = vadd.f32 %v595, %v676
    %v703 = vadd.f32 %v555, %v677
    %v704 = vadd.f32 %v598, %v678
    %v705 = vmul.f32 %v679, 0.7978846
    %v706 = vmul.f32 %v680, 0.7978846
    %v707 = vmul.f32 %v681, 0.7978846
    %v708 = vmul.f32 %v682, 0.7978846
    %v709 = vmul.f32 %v683, 0.7978846
    %v710 = vmul.f32 %v684, 0.7978846
    %v711 = vmul.f32 %v685, 0.7978846
    %v712 = vmul.f32 %v686, 0.7978846
    %v713 = vmul.f32 %v687, 0.7978846
    %v714 = vmul.f32 %v688, 0.7978846
    %v715 = vmul.f32 %v689, 0.7978846
    %v716 = vmul.f32 %v690, 0.7978846
    %v717 = vmul.f32 %v691, 0.7978846
    %v718 = vmul.f32 %v692, 0.7978846
    %v719 = vmul.f32 %v693, 0.7978846
    %v720 = vmul.f32 %v694, 0.7978846
    %v721 = vmul.f32 %v695, 0.7978846
    %v722 = vmul.f32 %v696, 0.7978846
    %v723 = vmul.f32 %v697, 0.7978846
    %v724 = vmul.f32 %v698, 0.7978846
    %v725 = vmul.f32 %v699, 0.7978846
    %v726 = vmul.f32 %v700, 0.7978846
    %v727 = vmul.f32 %v701, 0.7978846
    %v728 = vmul.f32 %v702, 0.7978846
    %v729 = vmul.f32 %v703, 0.7978846
    %v730 = vmul.f32 %v704, 0.7978846
    %v731 = vtanh.pop %v705
    %v732 = vtanh.pop %v706
    %v733 = vtanh.pop %v707
    %v734 = vtanh.pop %v708
    %v735 = vtanh.pop %v709
    %v736 = vtanh.pop %v710
    %v737 = vtanh.pop %v711
    %v738 = vtanh.pop %v712
    %v739 = vtanh.pop %v713
    %v740 = vtanh.pop %v714
    %v741 = vtanh.pop %v715
    %v742 = vtanh.pop %v716
    %v743 = vtanh.pop %v717
    %v744 = vtanh.pop %v718
    %v745 = vtanh.pop %v719
    %v746 = vtanh.pop %v720
    %v747 = vtanh.pop %v721
    %v748 = vtanh.pop %v722
    %v749 = vtanh.pop %v723
    %v750 = vtanh.pop %v724
    %v751 = vtanh.pop %v725
    %v752 = vtanh.pop %v726
    %v753 = vtanh.pop %v727
    %v754 = vtanh.pop %v728
    %v755 = vtanh.pop %v729
    %v756 = vtanh.pop %v730
    %v757 = vadd.f32 %v731, 1.0
    %v758 = vadd.f32 %v732, 1.0
    %v759 = vadd.f32 %v733, 1.0
    %v760 = vadd.f32 %v734, 1.0
    %v761 = vadd.f32 %v735, 1.0
    %v762 = vadd.f32 %v736, 1.0
    %v763 = vadd.f32 %v737, 1.0
    %v764 = vadd.f32 %v738, 1.0
    %v765 = vadd.f32 %v739, 1.0
    %v766 = vadd.f32 %v740, 1.0
    %v767 = vadd.f32 %v741, 1.0
    %v768 = vadd.f32 %v742, 1.0
    %v769 = vadd.f32 %v743, 1.0
    %v770 = vadd.f32 %v744, 1.0
    %v771 = vadd.f32 %v745, 1.0
    %v772 = vadd.f32 %v746, 1.0
    %v773 = vadd.f32 %v747, 1.0
    %v774 = vadd.f32 %v748, 1.0
    %v775 = vadd.f32 %v749, 1.0
    %v776 = vadd.f32 %v750, 1.0
    %v777 = vadd.f32 %v751, 1.0
    %v778 = vadd.f32 %v752, 1.0
    %v779 = vadd.f32 %v753, 1.0
    %v780 = vadd.f32 %v754, 1.0
    %v781 = vadd.f32 %v755, 1.0
    %v782 = vadd.f32 %v756, 1.0
    %v783 = vmul.f32 %v757, 0.5
    %v784 = vmul.f32 %v758, 0.5
    %v785 = vmul.f32 %v759, 0.5
    %v786 = vmul.f32 %v760, 0.5
    %v787 = vmul.f32 %v761, 0.5
    %v788 = vmul.f32 %v762, 0.5
    %v789 = vmul.f32 %v763, 0.5
    %v790 = vmul.f32 %v764, 0.5
    %v791 = vmul.f32 %v765, 0.5
    %v792 = vmul.f32 %v766, 0.5
    %v793 = vmul.f32 %v767, 0.5
    %v794 = vmul.f32 %v768, 0.5
    %v795 = vmul.f32 %v769, 0.5
    %v796 = vmul.f32 %v770, 0.5
    %v797 = vmul.f32 %v771, 0.5
    %v798 = vmul.f32 %v772, 0.5
    %v799 = vmul.f32 %v773, 0.5
    %v800 = vmul.f32 %v774, 0.5
    %v801 = vmul.f32 %v775, 0.5
    %v802 = vmul.f32 %v776, 0.5
    %v803 = vmul.f32 %v777, 0.5
    %v804 = vmul.f32 %v778, 0.5
    %v805 = vmul.f32 %v779, 0.5
    %v806 = vmul.f32 %v780, 0.5
    %v807 = vmul.f32 %v781, 0.5
    %v808 = vmul.f32 %v782, 0.5
    %v809 = vmul.f32 %v525, %v783
    %v810 = vmul.f32 %v568, %v784
    %v811 = vmul.f32 %v527, %v785
    %v812 = vmul.f32 %v570, %v786
    %v813 = vmul.f32 %v530, %v787
    %v814 = vmul.f32 %v573, %v788
    %v815 = vmul.f32 %v532, %v789
    %v816 = vmul.f32 %v575, %v790
    %v817 = vmul.f32 %v535, %v791
    %v818 = vmul.f32 %v578, %v792
    %v819 = vmul.f32 %v537, %v793
    %v820 = vmul.f32 %v580, %v794
    %v821 = vmul.f32 %v540, %v795
    %v822 = vmul.f32 %v583, %v796
    %v823 = vmul.f32 %v542, %v797
    %v824 = vmul.f32 %v585, %v798
    %v825 = vmul.f32 %v545, %v799
    %v826 = vmul.f32 %v588, %v800
    %v827 = vmul.f32 %v547, %v801
    %v828 = vmul.f32 %v590, %v802
    %v829 = vmul.f32 %v550, %v803
    %v830 = vmul.f32 %v593, %v804
    %v831 = vmul.f32 %v552, %v805
    %v832 = vmul.f32 %v595, %v806
    %v833 = vmul.f32 %v555, %v807
    %v834 = vmul.f32 %v598, %v808
    %835 = vst [vmem:[#allocation8] sm:$0xff] %v809
    %836 = vst [vmem:[#allocation8 + $0x8] sm:$0xff] %v810
    %837 = vst [vmem:[#allocation8 + $0x10] sm:$0xff] %v811
    %838 = vst [vmem:[#allocation8 + $0x18] sm:$0xff] %v812
    %839 = vst [vmem:[#allocation8 + $0x20] sm:$0xff] %v813
    %840 = vst [vmem:[#allocation8 + $0x28] sm:$0xff] %v814
    %841 = vst [vmem:[#allocation8 + $0x30] sm:$0xff] %v815
    %842 = vst [vmem:[#allocation8 + $0x38] sm:$0xff] %v816
    %843 = vst [vmem:[#allocation8 + $0x40] sm:$0xff] %v817
    %844 = vst [vmem:[#allocation8 + $0x48] sm:$0xff] %v818
    %845 = vst [vmem:[#allocation8 + $0x50] sm:$0xff] %v819
    %846 = vst [vmem:[#allocation8 + $0x58] sm:$0xff] %v820
    %847 = vst [vmem:[#allocation8 + $0x60] sm:$0xff] %v821
    %848 = vst [vmem:[#allocation8 + $0x68] sm:$0xff] %v822
    %849 = vst [vmem:[#allocation8 + $0x70] sm:$0xff] %v823
    %850 = vst [vmem:[#allocation8 + $0x78] sm:$0xff] %v824
    %851 = vst [vmem:[#allocation8 + $0x80] sm:$0xff] %v825
    %852 = vst [vmem:[#allocation8 + $0x88] sm:$0xff] %v826
    %853 = vst [vmem:[#allocation8 + $0x90] sm:$0xff] %v827
    %854 = vst [vmem:[#allocation8 + $0x98] sm:$0xff] %v828
    %855 = vst [vmem:[#allocation8 + $0xa0] sm:$0xff] %v829
    %856 = vst [vmem:[#allocation8 + $0xa8] sm:$0xff] %v830
    %857 = vst [vmem:[#allocation8 + $0xb0] sm:$0xff] %v831
    %858 = vst [vmem:[#allocation8 + $0xb8] sm:$0xff] %v832
    %859 = vst [vmem:[#allocation8 + $0xc0] sm:$0xff] %v833
    %860 = vst [vmem:[#allocation8 + $0xc8] sm:$0xff] %v834
    // Predicated region
    $region34: #{tpu_custom_call.1} parent=1 // pred_check
      _
    $region35: #{tpu_custom_call.1} parent=1 // pred_check_branch
      %862 = sbr.rel (0) target = $region37
    $region36: #{tpu_custom_call.1} parent=1 // pred_region
      %864 = vsyncadd [#allocation4], 0
      %s865 = sshll.u32 [#allocation8], 4
      %s866 = int_to_ptr.vmem [resolvable:$true] %s865
      %s867 = sshll.u32 %s5, 4
      %s868 = int_to_ptr.hbm [resolvable:$true] %s867
      %873 = dma.vmem_to_hbm [thread:$0]  %s866, 3328, %s868, [#allocation4], 256, 256, 16
    $region37: #{tpu_custom_call.1} parent=1 // pred_fallthru
      _
    // Predicated region
    $region38: #{tpu_custom_call.1} parent=1 // pred_check
      _
    $region39: #{tpu_custom_call.1} parent=1 // pred_check_branch
      %875 = sbr.rel (0) target = $region41
    $region40: #{tpu_custom_call.1} parent=1 // pred_region
      %877 = dma.done [#allocation4], 3328
    $region41: #{tpu_custom_call.1} parent=1 // pred_fallthru
      _
    %878 = vsyncpa [#allocation3], 1
    %879 = vsyncpa [#allocation6], 1
    %880 = vsyncpa [#allocation4], 1

</llo_original>
